<compile_context>
chip_gen: v7x
topology: tpu7x:2x2x1
jax: 0.10.0
libtpu: 0.0.40
codegen_flags: <defaults>
</compile_context>

<pallas_src>
import functools

import jax
import jax.numpy as jnp
from jax import lax
from jax.experimental import pallas as pl
from jax.experimental.pallas import tpu as pltpu


def _gather_wsum_kernel(total_rows, pack, seg_width, lab_ref, prob_ref, out_ref):
    """Per-tile partial of sum_i label_i * log(prob[i, label_i]).

    prob_ref : (tile, L) block of the (possibly lane-packed) probability matrix,
               where L = pack * seg_width and each packed row carries `pack`
               original rows in disjoint `seg_width`-lane segments.
    lab_ref  : (tile, pack) int32 block of segment-adjusted labels,
               adj = (orig_row % pack) * seg_width + label.
    """
    i = pl.program_id(0)
    tile, lane_width = prob_ref.shape

    probs = prob_ref[...]                              # native dtype (f32 / bf16)
    adj = lab_ref[...]                                 # (tile, pack) int32

    col = lax.broadcasted_iota(jnp.int32, (tile, lane_width), 1)
    row = lax.broadcasted_iota(jnp.int32, (tile, 1), 0)
    # Ragged-last-tile validity, applied only at (tile, 1) width (no full-width
    # VALU op).  Rows % pack == 0 is guaranteed by the wrapper, so validity is
    # identical for every segment of a packed row.
    valid = (i * tile + row) < total_rows              # (tile, 1) bool

    acc = jnp.zeros((tile, 1), jnp.float32)
    for s in range(pack):                              # static, small (<= 4)
        a_s = adj[:, s:s + 1]                          # (tile, 1) adjusted label
        m = col == a_s                                 # one-hot along lanes
        g = jnp.sum(jnp.where(m, probs, 0), axis=1, keepdims=True)
        g = g.astype(jnp.float32)                      # gathered prob, (tile, 1)
        w = (a_s - s * seg_width).astype(jnp.float32)  # original integer label
        # log AFTER the gather; garbage from OOB reads in the ragged tail only
        # ever appears inside the select's dead branch, so NaN/-inf never leaks.
        acc = acc + jnp.where(valid, w * jnp.log(g), 0.0)

    partial = jnp.sum(acc)
    # Lane-dense partial-sum block; tiles are independent -> "parallel" grid.
    out_ref[...] = jnp.full(out_ref.shape, partial, dtype=out_ref.dtype)


_SMALL_PACKED_ROWS = 64     # below this a plain-XLA gather beats a kernel launch


def _vmem_budget():
    """Returns (per-buffer-pair byte budget, vmem_limit_bytes) per generation."""
    cap = 64 << 20                                   # conservative: v7x per-TC VMEM
    try:
        info = pltpu.get_tpu_info()
        cap = int(getattr(info, "vmem_capacity_bytes", cap) or cap)
    except Exception:
        pass
    # Total double-buffered working set: ~48 MiB on v5e/v6e (128 MiB VMEM),
    # ~45 MiB on v7x (64 MiB per-TC VMEM) -> per-pair budget is half of that.
    total = min(48 << 20, int(cap * 0.7))
    pair = total // 2
    limit = min(int(cap * 0.9), total + (8 << 20))
    return pair, limit


def _pick_tile(packed_rows, lane_width, prob_itemsize, pair_budget, block_rows):
    if block_rows is not None:
        tile = int(block_rows)
    else:
        padded_lanes = -(-lane_width // 128) * 128            # VMEM lane padding
        row_bytes = padded_lanes * prob_itemsize + 128 * 4    # probs + padded labels
        tile = pair_budget // row_bytes
        # Keep >= 2 tiles so the "parallel" axis splits over v7x's 2 TensorCores.
        tile = min(tile, -(-packed_rows // 2))
    tile = min(tile, (packed_rows // 32) * 32)                # never exceed the array
    tile = max(32, (tile // 32) * 32)       # multiple of 32: covers f32/bf16/int8 tiling
    return tile


def _cic_gather_sum(labels, probs, *, block_rows=None, probs_compute_dtype=None):
    """sum_i labels_i * log(probs[i, labels_i]) via a Pallas TPU kernel.

    block_rows:          optional override of the per-tile (packed) row count.
    probs_compute_dtype: optionally cast the probabilities (e.g. jnp.bfloat16)
                         before the kernel; halves HBM bytes on this HBM-bound
                         kernel but rounds the gathered probability.  Default
                         keeps the input dtype (exact reference numerics).
    """
    labels = jnp.asarray(labels).reshape(-1).astype(jnp.int32)
    probs = jnp.asarray(probs)
    probs = probs.reshape(probs.shape[0], -1)            # (N,C,1[,1]) -> (N,C)
    if not jnp.issubdtype(probs.dtype, jnp.floating):
        probs = probs.astype(jnp.float32)
    if probs_compute_dtype is not None:
        probs = probs.astype(probs_compute_dtype)
    rows, num_classes = probs.shape

    # Lane packing: view (P, C) as (P/pack, pack*C) when C is narrow so the
    # probability block is lane-dense.  Only applied when rows % pack == 0
    # (the reshape is then a free, contiguous view -- no big HBM copy).
    pack = max(1, 128 // num_classes)
    while pack > 1 and rows % pack != 0:
        pack -= 1
    packed_rows = rows // pack
    lane_width = pack * num_classes

    if packed_rows < _SMALL_PACKED_ROWS:
        # Tiny input (e.g. the (N=2, 1000) classification head): a whole kernel
        # launch is pure fixed overhead -> plain XLA gather inside the same jit.
        gathered = jnp.take_along_axis(probs, labels[:, None], axis=1)[:, 0]
        return jnp.sum(labels.astype(jnp.float32) *
                       jnp.log(gathered.astype(jnp.float32)))

    # Segment-adjusted labels: adj_i = (i % pack) * C + label_i (tiny XLA ops on
    # the small label vector; the big probability array is never copied).
    if pack > 1:
        adj = labels + (jnp.arange(rows, dtype=jnp.int32) % pack) * num_classes
        probs_view = probs.reshape(packed_rows, lane_width)   # free reshape
    else:
        adj = labels
        probs_view = probs
    adj = adj.reshape(packed_rows, pack)

    pair_budget, vmem_limit = _vmem_budget()
    tile = _pick_tile(packed_rows, lane_width, probs_view.dtype.itemsize,
                      pair_budget, block_rows)
    num_tiles = -(-packed_rows // tile)

    kernel = functools.partial(_gather_wsum_kernel, packed_rows, pack, num_classes)
    cost = pl.CostEstimate(
        flops=int((3 * pack + 3) * packed_rows * lane_width),
        transcendentals=int(rows),
        bytes_accessed=int(packed_rows * lane_width * probs_view.dtype.itemsize
                           + rows * 4 + num_tiles * 512),
    )

    partials = pl.pallas_call(
        kernel,
        out_shape=jax.ShapeDtypeStruct((num_tiles, 1, 128), jnp.float32),
        grid_spec=pltpu.PrefetchScalarGridSpec(
            num_scalar_prefetch=0,
            grid=(num_tiles,),
            in_specs=[
                pl.BlockSpec((tile, pack), lambda i: (i, 0)),
                pl.BlockSpec((tile, lane_width), lambda i: (i, 0)),
            ],
            out_specs=pl.BlockSpec((1, 1, 128), lambda i: (i, 0, 0)),
        ),
        compiler_params=pltpu.CompilerParams(
            dimension_semantics=("parallel",),
            vmem_limit_bytes=int(vmem_limit)),
        cost_estimate=cost,
    )(adj, probs_view)

    return jnp.sum(partials[:, 0, 0])


@functools.partial(jax.jit, static_argnames=("lambda_col", "lambda_cls"))
def cic_cross_entropy_loss(true_category_label,
                           predicted_category_distribution,
                           predicted_color_distribution,
                           true_color_class,
                           lambda_col: float = 1.0,
                           lambda_cls: float = 0.003):
    l_col = _cic_gather_sum(true_color_class, predicted_color_distribution)
    l_cls = _cic_gather_sum(true_category_label, predicted_category_distribution)
    return lambda_col * l_col + lambda_cls * l_cls


def _reference_loss(cat_lab, cat_dist, col_dist, col_lab,
                    lambda_col=1.0, lambda_cls=0.003):
    def gsum(lab, p):
        g = jnp.log(p)[jnp.arange(p.shape[0]), lab]
        return jnp.sum(lab.astype(jnp.float32) * g)
    return lambda_col * gsum(col_lab, col_dist) + lambda_cls * gsum(cat_lab, cat_dist)


if __name__ == "__main__":
    key = jax.random.PRNGKey(0)
    k1, k2, k3, k4, k5, k6, k7, k8 = jax.random.split(key, 8)

    # Small shapes: batch=2, category classes=1000 (as in docstring),
    # colorization: 32 color bins over a 16x16 spatial map.
    N, C_CAT = 2, 1000
    Q, H, W = 32, 16, 16

    # Classification branch.
    cat_logits = jax.random.normal(k1, (N, C_CAT), dtype=jnp.float32)
    predicted_category_distribution = jax.nn.softmax(cat_logits, axis=1)
    true_category_label = jax.random.randint(k2, (N,), 0, C_CAT, dtype=jnp.int32)

    # Colorization branch: network emits NCHW (N, Q, H, W); flatten to (P, Q),
    # matching the 2-D layout torch's .gather(dim=1, ...) requires.
    col_logits_nchw = jax.random.normal(k3, (N, Q, H, W), dtype=jnp.float32)
    col_probs_nchw = jax.nn.softmax(col_logits_nchw, axis=1)
    predicted_color_distribution = (
        jnp.transpose(col_probs_nchw, (0, 2, 3, 1)).reshape(-1, Q))  # (N*H*W, Q)
    true_color_class = jax.random.randint(
        k4, (N * H * W,), 0, Q, dtype=jnp.int32)

    loss = cic_cross_entropy_loss(
        true_category_label,
        predicted_category_distribution,
        predicted_color_distribution,
        true_color_class,
        lambda_col=1.0,
        lambda_cls=0.003,
    )
    loss = jax.block_until_ready(loss)

    ref = _reference_loss(
        true_category_label, predicted_category_distribution,
        predicted_color_distribution, true_color_class,
        lambda_col=1.0, lambda_cls=0.003)
    assert jnp.allclose(loss, ref, rtol=1e-5, atol=1e-2), (loss, ref)

    # Packed path (C=32 -> 4 rows per 128-lane row): multi-tile grid + ragged
    # (in-kernel masked) last tile.
    P2 = 300
    probs2 = jax.nn.softmax(
        jax.random.normal(k5, (P2, Q), dtype=jnp.float32), axis=1)
    lab2 = jax.random.randint(k6, (P2,), 0, Q, dtype=jnp.int32)
    got = jax.block_until_ready(_cic_gather_sum(lab2, probs2, block_rows=32))
    want = jnp.sum(lab2.astype(jnp.float32) *
                   jnp.log(probs2)[jnp.arange(P2), lab2])
    assert jnp.allclose(got, want, rtol=1e-4, atol=1e-2), (got, want)

    # Unpacked path (C > 64): multi-tile grid + ragged last tile.
    P3, C3 = 520, 200
    probs3 = jax.nn.softmax(
        jax.random.normal(k7, (P3, C3), dtype=jnp.float32), axis=1)
    lab3 = jax.random.randint(k8, (P3,), 0, C3, dtype=jnp.int32)
    got3 = jax.block_until_ready(_cic_gather_sum(lab3, probs3, block_rows=128))
    want3 = jnp.sum(lab3.astype(jnp.float32) *
                    jnp.log(probs3)[jnp.arange(P3), lab3])
    assert jnp.allclose(got3, want3, rtol=1e-4, atol=1e-2), (got3, want3)

    print("KERNEL_OK")
</pallas_src>

<mosaic_0001>
module attributes {stable_mosaic.version = 11 : i64} {
  func.func @_gather_wsum_kernel(%arg0: i32, %arg1: memref<64x4xi32, #tpu.memory_space<vmem>>, %arg2: memref<64x128xf32, #tpu.memory_space<vmem>>, %arg3: memref<1x1x128xf32, #tpu.memory_space<vmem>>) attributes {dimension_semantics = [#tpu.dimension_semantics<parallel>], iteration_bounds = array<i64: 2>, scalar_prefetch = 0 : i64, scratch_operands = 0 : i64, tpu.core_type = #tpu.core_type<tc>, window_params = [{transform_indices = @transform_0, window_bounds = array<i64: 64, 4>}, {transform_indices = @transform_1, window_bounds = array<i64: 64, 128>}, {transform_indices = @transform_2, window_bounds = array<i64: 1, 1, 128>}]} {
    %c0 = arith.constant 0 : index
    %c0_0 = arith.constant 0 : index
    %0 = vector.load %arg2[%c0, %c0_0] : memref<64x128xf32, #tpu.memory_space<vmem>>, vector<64x128xf32>
    %c0_1 = arith.constant 0 : index
    %c0_2 = arith.constant 0 : index
    %1 = vector.load %arg1[%c0_1, %c0_2] : memref<64x4xi32, #tpu.memory_space<vmem>>, vector<64x4xi32>
    %2 = tpu.iota {dimensions = array<i32: 1>} : vector<64x128xi32>
    %3 = tpu.iota {dimensions = array<i32: 0>} : vector<64x1xi32>
    %c64_i32 = arith.constant 64 : i32
    %4 = arith.muli %arg0, %c64_i32 : i32
    %5 = vector.broadcast %4 : i32 to vector<64x1xi32>
    %6 = arith.addi %5, %3 : vector<64x1xi32>
    %c128_i32 = arith.constant 128 : i32
    %7 = vector.broadcast %c128_i32 : i32 to vector<64x1xi32>
    %8 = arith.cmpi slt, %6, %7 : vector<64x1xi32>
    %cst = arith.constant 0.000000e+00 : f32
    %9 = vector.broadcast %cst : f32 to vector<64x1xf32>
    %10 = vector.extract_strided_slice %1 {offsets = [0, 0], sizes = [64, 1], strides = [1, 1]} : vector<64x4xi32> to vector<64x1xi32>
    %11 = vector.broadcast %10 : vector<64x1xi32> to vector<64x128xi32>
    %12 = arith.cmpi eq, %2, %11 : vector<64x128xi32>
    %c0_i32 = arith.constant 0 : i32
    %13 = arith.sitofp %c0_i32 : i32 to f32
    %14 = vector.broadcast %13 : f32 to vector<64x128xf32>
    %15 = arith.select %12, %0, %14 : vector<64x128xi1>, vector<64x128xf32>
    %cst_3 = arith.constant dense<0.000000e+00> : vector<64xf32>
    %16 = vector.multi_reduction <add>, %15, %cst_3 [1] : vector<64x128xf32> to vector<64xf32>
    %17 = vector.shape_cast %16 : vector<64xf32> to vector<64x1xf32>
    %c0_i32_4 = arith.constant 0 : i32
    %18 = vector.broadcast %c0_i32_4 : i32 to vector<64x1xi32>
    %19 = arith.subi %10, %18 : vector<64x1xi32>
    %20 = arith.sitofp %19 : vector<64x1xi32> to vector<64x1xf32>
    %21 = math.log %17 : vector<64x1xf32>
    %22 = arith.mulf %20, %21 : vector<64x1xf32>
    %cst_5 = arith.constant 0.000000e+00 : f32
    %23 = vector.broadcast %cst_5 : f32 to vector<64x1xf32>
    %24 = arith.select %8, %22, %23 : vector<64x1xi1>, vector<64x1xf32>
    %25 = arith.addf %9, %24 : vector<64x1xf32>
    %26 = vector.extract_strided_slice %1 {offsets = [0, 1], sizes = [64, 1], strides = [1, 1]} : vector<64x4xi32> to vector<64x1xi32>
    %27 = vector.broadcast %26 : vector<64x1xi32> to vector<64x128xi32>
    %28 = arith.cmpi eq, %2, %27 : vector<64x128xi32>
    %c0_i32_6 = arith.constant 0 : i32
    %29 = arith.sitofp %c0_i32_6 : i32 to f32
    %30 = vector.broadcast %29 : f32 to vector<64x128xf32>
    %31 = arith.select %28, %0, %30 : vector<64x128xi1>, vector<64x128xf32>
    %cst_7 = arith.constant dense<0.000000e+00> : vector<64xf32>
    %32 = vector.multi_reduction <add>, %31, %cst_7 [1] : vector<64x128xf32> to vector<64xf32>
    %33 = vector.shape_cast %32 : vector<64xf32> to vector<64x1xf32>
    %c32_i32 = arith.constant 32 : i32
    %34 = vector.broadcast %c32_i32 : i32 to vector<64x1xi32>
    %35 = arith.subi %26, %34 : vector<64x1xi32>
    %36 = arith.sitofp %35 : vector<64x1xi32> to vector<64x1xf32>
    %37 = math.log %33 : vector<64x1xf32>
    %38 = arith.mulf %36, %37 : vector<64x1xf32>
    %cst_8 = arith.constant 0.000000e+00 : f32
    %39 = vector.broadcast %cst_8 : f32 to vector<64x1xf32>
    %40 = arith.select %8, %38, %39 : vector<64x1xi1>, vector<64x1xf32>
    %41 = arith.addf %25, %40 : vector<64x1xf32>
    %42 = vector.extract_strided_slice %1 {offsets = [0, 2], sizes = [64, 1], strides = [1, 1]} : vector<64x4xi32> to vector<64x1xi32>
    %43 = vector.broadcast %42 : vector<64x1xi32> to vector<64x128xi32>
    %44 = arith.cmpi eq, %2, %43 : vector<64x128xi32>
    %c0_i32_9 = arith.constant 0 : i32
    %45 = arith.sitofp %c0_i32_9 : i32 to f32
    %46 = vector.broadcast %45 : f32 to vector<64x128xf32>
    %47 = arith.select %44, %0, %46 : vector<64x128xi1>, vector<64x128xf32>
    %cst_10 = arith.constant dense<0.000000e+00> : vector<64xf32>
    %48 = vector.multi_reduction <add>, %47, %cst_10 [1] : vector<64x128xf32> to vector<64xf32>
    %49 = vector.shape_cast %48 : vector<64xf32> to vector<64x1xf32>
    %c64_i32_11 = arith.constant 64 : i32
    %50 = vector.broadcast %c64_i32_11 : i32 to vector<64x1xi32>
    %51 = arith.subi %42, %50 : vector<64x1xi32>
    %52 = arith.sitofp %51 : vector<64x1xi32> to vector<64x1xf32>
    %53 = math.log %49 : vector<64x1xf32>
    %54 = arith.mulf %52, %53 : vector<64x1xf32>
    %cst_12 = arith.constant 0.000000e+00 : f32
    %55 = vector.broadcast %cst_12 : f32 to vector<64x1xf32>
    %56 = arith.select %8, %54, %55 : vector<64x1xi1>, vector<64x1xf32>
    %57 = arith.addf %41, %56 : vector<64x1xf32>
    %58 = vector.extract_strided_slice %1 {offsets = [0, 3], sizes = [64, 1], strides = [1, 1]} : vector<64x4xi32> to vector<64x1xi32>
    %59 = vector.broadcast %58 : vector<64x1xi32> to vector<64x128xi32>
    %60 = arith.cmpi eq, %2, %59 : vector<64x128xi32>
    %c0_i32_13 = arith.constant 0 : i32
    %61 = arith.sitofp %c0_i32_13 : i32 to f32
    %62 = vector.broadcast %61 : f32 to vector<64x128xf32>
    %63 = arith.select %60, %0, %62 : vector<64x128xi1>, vector<64x128xf32>
    %cst_14 = arith.constant dense<0.000000e+00> : vector<64xf32>
    %64 = vector.multi_reduction <add>, %63, %cst_14 [1] : vector<64x128xf32> to vector<64xf32>
    %65 = vector.shape_cast %64 : vector<64xf32> to vector<64x1xf32>
    %c96_i32 = arith.constant 96 : i32
    %66 = vector.broadcast %c96_i32 : i32 to vector<64x1xi32>
    %67 = arith.subi %58, %66 : vector<64x1xi32>
    %68 = arith.sitofp %67 : vector<64x1xi32> to vector<64x1xf32>
    %69 = math.log %65 : vector<64x1xf32>
    %70 = arith.mulf %68, %69 : vector<64x1xf32>
    %cst_15 = arith.constant 0.000000e+00 : f32
    %71 = vector.broadcast %cst_15 : f32 to vector<64x1xf32>
    %72 = arith.select %8, %70, %71 : vector<64x1xi1>, vector<64x1xf32>
    %73 = arith.addf %57, %72 : vector<64x1xf32>
    %74 = vector.shape_cast %73 : vector<64x1xf32> to vector<1x64x1xf32>
    %cst_16 = arith.constant dense<0.000000e+00> : vector<1xf32>
    %75 = vector.multi_reduction <add>, %74, %cst_16 [1, 2] : vector<1x64x1xf32> to vector<1xf32>
    %76 = vector.shape_cast %75 : vector<1xf32> to vector<1x1x1xf32>
    %77 = vector.extract %76[0, 0, 0] : f32 from vector<1x1x1xf32>
    %78 = vector.broadcast %77 : f32 to vector<1x1x128xf32>
    %c0_17 = arith.constant 0 : index
    %c0_18 = arith.constant 0 : index
    %c0_19 = arith.constant 0 : index
    %79 = vector.load %arg3[%c0_17, %c0_18, %c0_19] : memref<1x1x128xf32, #tpu.memory_space<vmem>>, vector<1x1x128xf32>
    tpu.vector_store %arg3[%c0_17, %c0_18, %c0_19], %78 {strides = array<i32>} : memref<1x1x128xf32, #tpu.memory_space<vmem>>, vector<1x1x128xf32>,
    return
  }
  func.func @transform_0(%arg0: i32) -> (i32, i32) {
    %c0_i32 = arith.constant 0 : i32
    %c0_i32_0 = arith.constant 0 : i32
    return %arg0, %c0_i32 : i32, i32
  }
  func.func @transform_1(%arg0: i32) -> (i32, i32) {
    %c0_i32 = arith.constant 0 : i32
    %c0_i32_0 = arith.constant 0 : i32
    return %arg0, %c0_i32 : i32, i32
  }
  func.func @transform_2(%arg0: i32) -> (i32, i32, i32) {
    %c0_i32 = arith.constant 0 : i32
    %c0_i32_0 = arith.constant 0 : i32
    %c0_i32_1 = arith.constant 0 : i32
    return %arg0, %c0_i32, %c0_i32_0 : i32, i32, i32
  }
}

</mosaic_0001>

<llo_original>
// kernel: cic_cross_entropy_loss.1
$region0: #{cic_cross_entropy_loss.1}
  #allocation0 [shape = 'u32[]', space=smem, size = 0x4, offset = 0x4, fixed_abs, tag = 'smem constant byte address 0x4 - core index']
  #allocation1 [shape = 'u32[144,128]{1,0:T(1,128)}', space=vmem, size = 0x12000, scoped, tag = 'internal scratch']
  %s0 = inlined_call_operand.vmem [shape: s32[128,4], index: 0, kind: input, shape index: {}]
  %s1 = inlined_call_operand.vmem [shape: f32[128,128], index: 1, kind: input, shape index: {}]
  %s2 = inlined_call_operand.vmem [shape: f32[2,1,128], index: 2, kind: output, shape index: {}]
  %s3 = sld [smem:[#allocation0]]
  $region41: #{cic_cross_entropy_loss.1} parent=0
    _
  %s5 = ssub.s32 1, %s3
  %s6 = scalar_select 0, %s5, %s3
  loop: start=0, step=1, limit=4
  $region2: #{cic_cross_entropy_loss.1} parent=0 // loop_pre_header
    _
  $region3: #{cic_cross_entropy_loss.1} parent=0 // loop_header
    %s8 = sphi 0, %s12
    %p9 = scmp.ge.s32.totalorder %s8, 4
    %s18 = sphi 0, %s20
    %s21 = sphi 0, %s18
    %s22 = sphi 0, %s21
    %s38 = sphi 0, %s22
    %s44 = sphi 0, %s46
    %s47 = sphi 0, %s44
    %s48 = sphi 0, %s47
    %s64 = sphi 0, %s48
    %s70 = sphi 0, %s72
    %s73 = sphi 0, %s70
    %s74 = sphi 0, %s73
    %s90 = sphi 0, %s74
  $region4: #{cic_cross_entropy_loss.1} parent=0 // loop_header_branch
    %11 = sbr.rel (%p9) target = $region8
  $region5: #{cic_cross_entropy_loss.1} parent=0 // loop_body
    %s13 = ssub.s32 %s8, 1
    %s14 = ssub.s32 %s8, 2
    %s15 = sadd.s32 %s8, 1
    %s16 = ssub.s32 %s8, %s15
    %p17 = scmp.eq.s32.totalorder %s16, 0
    %s19 = sadd.s32 %s18, 1
    %s20 = scalar_select %p17, %s18, %s19
    %p23 = pneg %p17
    %p24 = scmp.eq.s32.totalorder %s8, 1
    %p25 = por %p23, %p24
    %p26 = scmp.ne.s32.totalorder %s18, %s21
    %p27 = scmp.eq.s32.totalorder %s8, 0
    %p28 = por %p26, %p27
    %p29 = scmp.ne.s32.totalorder %s18, %s21
    %p30 = scmp.eq.s32.totalorder %s13, 1
    %p31 = por %p29, %p30
    %p32 = scmp.ne.s32.totalorder %s21, %s22
    %p33 = scmp.eq.s32.totalorder %s13, 0
    %p34 = por %p32, %p33
    %p35 = scmp.ne.s32.totalorder %s21, %s22
    %p36 = scmp.eq.s32.totalorder %s14, 1
    %p37 = por %p35, %p36
    %p39 = scmp.ne.s32.totalorder %s22, %s38
    %p40 = scmp.eq.s32.totalorder %s14, 0
    %p41 = por %p39, %p40
    %s42 = ssub.s32 %s8, %s15
    %p43 = scmp.eq.s32.totalorder %s42, 0
    %s45 = sadd.s32 %s44, 1
    %s46 = scalar_select %p43, %s44, %s45
    %p49 = pneg %p43
    %p50 = scmp.eq.s32.totalorder %s8, 1
    %p51 = por %p49, %p50
    %p52 = scmp.ne.s32.totalorder %s44, %s47
    %p53 = scmp.eq.s32.totalorder %s8, 0
    %p54 = por %p52, %p53
    %p55 = scmp.ne.s32.totalorder %s44, %s47
    %p56 = scmp.eq.s32.totalorder %s13, 1
    %p57 = por %p55, %p56
    %p58 = scmp.ne.s32.totalorder %s47, %s48
    %p59 = scmp.eq.s32.totalorder %s13, 0
    %p60 = por %p58, %p59
    %p61 = scmp.ne.s32.totalorder %s47, %s48
    %p62 = scmp.eq.s32.totalorder %s14, 1
    %p63 = por %p61, %p62
    %p65 = scmp.ne.s32.totalorder %s48, %s64
    %p66 = scmp.eq.s32.totalorder %s14, 0
    %p67 = por %p65, %p66
    %s68 = ssub.s32 %s8, %s15
    %p69 = scmp.eq.s32.totalorder %s68, 0
    %s71 = sadd.s32 %s70, 1
    %s72 = scalar_select %p69, %s70, %s71
    %p75 = pneg %p69
    %p76 = scmp.eq.s32.totalorder %s8, 1
    %p77 = por %p75, %p76
    %p78 = scmp.ne.s32.totalorder %s70, %s73
    %p79 = scmp.eq.s32.totalorder %s8, 0
    %p80 = por %p78, %p79
    %p81 = scmp.ne.s32.totalorder %s70, %s73
    %p82 = scmp.eq.s32.totalorder %s13, 1
    %p83 = por %p81, %p82
    %p84 = scmp.ne.s32.totalorder %s73, %s74
    %p85 = scmp.eq.s32.totalorder %s13, 0
    %p86 = por %p84, %p85
    %p87 = scmp.ne.s32.totalorder %s73, %s74
    %p88 = scmp.eq.s32.totalorder %s14, 1
    %p89 = por %p87, %p88
    %p91 = scmp.ne.s32.totalorder %s74, %s90
    %p92 = scmp.eq.s32.totalorder %s14, 0
    %p93 = por %p91, %p92
    %p94 = scmp.le.s32.totalorder 1, %s8
    %p95 = scmp.lt.s32.totalorder %s8, 3
    %p96 = pnand %p94, %p95
    %p97 = pneg %p96
    // Predicated region
    $region9: #{cic_cross_entropy_loss.1} parent=5 // pred_check
      _
    $region10: #{cic_cross_entropy_loss.1} parent=5 // pred_check_branch
      %99 = sbr.rel (%p96) target = $region12
    $region11: #{cic_cross_entropy_loss.1} parent=5 // pred_region
      %s100 = ssub.s32 %s8, 1
    $region12: #{cic_cross_entropy_loss.1} parent=5 // pred_fallthru
      _
    %p101 = scmp.lt.s32.totalorder %s8, 2
    // Predicated region
    $region13: #{cic_cross_entropy_loss.1} parent=5 // pred_check
      %p102 = pneg %p101
    $region14: #{cic_cross_entropy_loss.1} parent=5 // pred_check_branch
      %104 = sbr.rel (%p102) target = $region16
    $region15: #{cic_cross_entropy_loss.1} parent=5 // pred_region
      // Predicated region
      $region17: #{cic_cross_entropy_loss.1} parent=15 // pred_check
        %p105 = pneg %p28
      $region18: #{cic_cross_entropy_loss.1} parent=15 // pred_check_branch
        %107 = sbr.rel (%p105) target = $region20
      $region19: #{cic_cross_entropy_loss.1} parent=15 // pred_region
        %s108 = smul.u32 8, %s8
        %p109 = scmp.lt.s32.totalorder %s108, 15
        %s110 = scalar_select %p109, %s108, 15
        %s111 = smul.addr %s110, 8
        %s112 = scalar_lea.vmem %s0, %s111
        %s113 = smul.u32 8, %s8
      $region20: #{cic_cross_entropy_loss.1} parent=15 // pred_fallthru
        _
      // Predicated region
      $region21: #{cic_cross_entropy_loss.1} parent=15 // pred_check
        %p114 = pneg %p54
      $region22: #{cic_cross_entropy_loss.1} parent=15 // pred_check_branch
        %116 = sbr.rel (%p114) target = $region24
      $region23: #{cic_cross_entropy_loss.1} parent=15 // pred_region
        %s117 = smul.u32 8, %s8
        %p118 = scmp.lt.s32.totalorder %s117, 15
        %s119 = scalar_select %p118, %s117, 15
        %s120 = smul.addr %s119, 8
        %s121 = scalar_lea.vmem %s1, %s120
        %s122 = smul.u32 8, %s8
      $region24: #{cic_cross_entropy_loss.1} parent=15 // pred_fallthru
        _
    $region16: #{cic_cross_entropy_loss.1} parent=5 // pred_fallthru
      _
    %p123 = scmp.le.s32.totalorder 1, %s8
    %p124 = scmp.lt.s32.totalorder %s8, 3
    %p125 = pnand %p123, %p124
    %p126 = pneg %p125
    // Predicated region
    $region25: #{cic_cross_entropy_loss.1} parent=5 // pred_check
      _
    $region26: #{cic_cross_entropy_loss.1} parent=5 // pred_check_branch
      %128 = sbr.rel (%p125) target = $region28
    $region27: #{cic_cross_entropy_loss.1} parent=5 // pred_region
      %s129 = ssub.s32 %s8, 1
      %s130 = smul.u32 8, %s13
      %p131 = scmp.lt.s32.totalorder %s130, 15
      %s132 = scalar_select %p131, %s130, 15
      %s133 = smul.addr %s132, 8
      %s134 = scalar_lea.vmem %s0, %s133
      %p135 = pneg %p34
      %p136 = pneg %p31
      %s137 = smul.u32 8, %s13
      %p138 = scmp.lt.s32.totalorder %s137, 15
      %s139 = scalar_select %p138, %s137, 15
      %s140 = smul.addr %s139, 8
      %s141 = scalar_lea.vmem %s1, %s140
      %p142 = pneg %p60
      %p143 = pneg %p57
      %p144 = pneg %p86
      %p145 = pneg %p83
      %p146 = scmp.lt.s32.totalorder %s13, 1
      %s147 = scalar_select %p146, %s13, 1
      %s148 = scalar_lea.vmem %s2, %s147
      %s149 = smul.u32 8, %s13
      %p150 = scmp.lt.s32.totalorder %s149, 15
      %s151 = scalar_select %p150, %s149, 15
      %s152 = smul.addr %s151, 8
      %s153 = scalar_lea.vmem %s0, %s152
      %s154 = smul.u32 8, %s13
      %s155 = smul.u32 8, %s13
      %p156 = scmp.lt.s32.totalorder %s155, 15
      %s157 = scalar_select %p156, %s155, 15
      %s158 = smul.addr %s157, 8
      %s159 = scalar_lea.vmem %s1, %s158
      %s160 = smul.u32 8, %s13
      %p161 = scmp.lt.s32.totalorder %s13, 1
      %s162 = scalar_select %p161, %s13, 1
      %s163 = scalar_lea.vmem %s2, %s162
      %v164 = vld [vmem:[%s159] sm:$0xff]
      %v165 = vld [vmem:[%s159 + $0x8] sm:$0xff]
      %v166 = vld [vmem:[%s159 + $0x10] sm:$0xff]
      %v167 = vld [vmem:[%s159 + $0x18] sm:$0xff]
      %v168 = vld [vmem:[%s159 + $0x20] sm:$0xff]
      %v169 = vld [vmem:[%s159 + $0x28] sm:$0xff]
      %v170 = vld [vmem:[%s159 + $0x30] sm:$0xff]
      %v171 = vld [vmem:[%s159 + $0x38] sm:$0xff]
      %v172 = vld [vmem:[%s153] sm:$0xff]
      %v173 = vld [vmem:[%s153 + $0x8] sm:$0xff]
      %v174 = vld [vmem:[%s153 + $0x10] sm:$0xff]
      %v175 = vld [vmem:[%s153 + $0x18] sm:$0xff]
      %v176 = vld [vmem:[%s153 + $0x20] sm:$0xff]
      %v177 = vld [vmem:[%s153 + $0x28] sm:$0xff]
      %v178 = vld [vmem:[%s153 + $0x30] sm:$0xff]
      %v179 = vld [vmem:[%s153 + $0x38] sm:$0xff]
      %v180 = vlaneseq
      %v181 = vand.u32 %v180, 127
      %v182 = vlaneseq
      %v183 = vshrl.u32 %v182, 7
      %v184 = vadd.s32 %v183, 8
      %v185 = vadd.s32 %v183, 16
      %v186 = vadd.s32 %v183, 24
      %v187 = vadd.s32 %v183, 32
      %v188 = vadd.s32 %v183, 40
      %v189 = vadd.s32 %v183, 48
      %v190 = vadd.s32 %v183, 56
      %s191 = smul.u32 %s13, 64
      %v192 = vstv %s191
      %v193 = vadd.s32 %v192, %v183
      %v194 = vadd.s32 %v192, %v184
      %v195 = vadd.s32 %v192, %v185
      %v196 = vadd.s32 %v192, %v186
      %v197 = vadd.s32 %v192, %v187
      %v198 = vadd.s32 %v192, %v188
      %v199 = vadd.s32 %v192, %v189
      %v200 = vadd.s32 %v192, %v190
      %vm201 = vcmp.lt.s32.totalorder %v193, 128
      %vm202 = vcmp.lt.s32.totalorder %v194, 128
      %vm203 = vcmp.lt.s32.totalorder %v195, 128
      %vm204 = vcmp.lt.s32.totalorder %v196, 128
      %vm205 = vcmp.lt.s32.totalorder %v197, 128
      %vm206 = vcmp.lt.s32.totalorder %v198, 128
      %vm207 = vcmp.lt.s32.totalorder %v199, 128
      %vm208 = vcmp.lt.s32.totalorder %v200, 128
      %209 = vset.pattern.permute.xlu0 0
      %210 = vperm.xlu0 %209, %v172
      %v211 = vpop.permute.xlu0 %210
      %212 = vset.pattern.permute.xlu0 0
      %213 = vperm.xlu0 %212, %v173
      %v214 = vpop.permute.xlu0 %213
      %215 = vset.pattern.permute.xlu0 0
      %216 = vperm.xlu0 %215, %v174
      %v217 = vpop.permute.xlu0 %216
      %218 = vset.pattern.permute.xlu0 0
      %219 = vperm.xlu0 %218, %v175
      %v220 = vpop.permute.xlu0 %219
      %221 = vset.pattern.permute.xlu0 0
      %222 = vperm.xlu0 %221, %v176
      %v223 = vpop.permute.xlu0 %222
      %224 = vset.pattern.permute.xlu0 0
      %225 = vperm.xlu0 %224, %v177
      %v226 = vpop.permute.xlu0 %225
      %227 = vset.pattern.permute.xlu0 0
      %228 = vperm.xlu0 %227, %v178
      %v229 = vpop.permute.xlu0 %228
      %230 = vset.pattern.permute.xlu0 0
      %231 = vperm.xlu0 %230, %v179
      %v232 = vpop.permute.xlu0 %231
      %vm233 = vcmp.eq.s32.totalorder %v181, %v211
      %vm234 = vcmp.eq.s32.totalorder %v181, %v214
      %vm235 = vcmp.eq.s32.totalorder %v181, %v217
      %vm236 = vcmp.eq.s32.totalorder %v181, %v220
      %vm237 = vcmp.eq.s32.totalorder %v181, %v223
      %vm238 = vcmp.eq.s32.totalorder %v181, %v226
      %vm239 = vcmp.eq.s32.totalorder %v181, %v229
      %vm240 = vcmp.eq.s32.totalorder %v181, %v232
      %v241 = vsel %vm233, %v164, 0.0
      %v242 = vsel %vm234, %v165, 0.0
      %v243 = vsel %vm235, %v166, 0.0
      %v244 = vsel %vm236, %v167, 0.0
      %v245 = vsel %vm237, %v168, 0.0
      %v246 = vsel %vm238, %v169, 0.0
      %v247 = vsel %vm239, %v170, 0.0
      %v248 = vsel %vm240, %v171, 0.0
      %249 = vadd.xlane.f32.xlu0 %v241
      %v250 = vpop.xlane.xlu0 %249
      %251 = vadd.xlane.f32.xlu0 %v242
      %v252 = vpop.xlane.xlu0 %251
      %253 = vadd.xlane.f32.xlu0 %v243
      %v254 = vpop.xlane.xlu0 %253
      %255 = vadd.xlane.f32.xlu0 %v244
      %v256 = vpop.xlane.xlu0 %255
      %257 = vadd.xlane.f32.xlu0 %v245
      %v258 = vpop.xlane.xlu0 %257
      %259 = vadd.xlane.f32.xlu0 %v246
      %v260 = vpop.xlane.xlu0 %259
      %261 = vadd.xlane.f32.xlu0 %v247
      %v262 = vpop.xlane.xlu0 %261
      %263 = vadd.xlane.f32.xlu0 %v248
      %v264 = vpop.xlane.xlu0 %263
      %v265 = vcvt.s32.f32 %v172
      %v266 = vcvt.s32.f32 %v173
      %v267 = vcvt.s32.f32 %v174
      %v268 = vcvt.s32.f32 %v175
      %v269 = vcvt.s32.f32 %v176
      %v270 = vcvt.s32.f32 %v177
      %v271 = vcvt.s32.f32 %v178
      %v272 = vcvt.s32.f32 %v179
      %v273 = vlog2.pop %v250
      %v274 = vmul.f32 %v273, 0.6931472
      %v275 = vlog2.pop %v252
      %v276 = vmul.f32 %v275, 0.6931472
      %v277 = vlog2.pop %v254
      %v278 = vmul.f32 %v277, 0.6931472
      %v279 = vlog2.pop %v256
      %v280 = vmul.f32 %v279, 0.6931472
      %v281 = vlog2.pop %v258
      %v282 = vmul.f32 %v281, 0.6931472
      %v283 = vlog2.pop %v260
      %v284 = vmul.f32 %v283, 0.6931472
      %v285 = vlog2.pop %v262
      %v286 = vmul.f32 %v285, 0.6931472
      %v287 = vlog2.pop %v264
      %v288 = vmul.f32 %v287, 0.6931472
      %v289 = vmul.f32 %v265, %v274
      %v290 = vmul.f32 %v266, %v276
      %v291 = vmul.f32 %v267, %v278
      %v292 = vmul.f32 %v268, %v280
      %v293 = vmul.f32 %v269, %v282
      %v294 = vmul.f32 %v270, %v284
      %v295 = vmul.f32 %v271, %v286
      %v296 = vmul.f32 %v272, %v288
      %v297 = vsel %vm201, %v289, 0.0
      %v298 = vsel %vm202, %v290, 0.0
      %v299 = vsel %vm203, %v291, 0.0
      %v300 = vsel %vm204, %v292, 0.0
      %v301 = vsel %vm205, %v293, 0.0
      %v302 = vsel %vm206, %v294, 0.0
      %v303 = vsel %vm207, %v295, 0.0
      %v304 = vsel %vm208, %v296, 0.0
      %v305 = vadd.f32 %v297, 0.0
      %v306 = vadd.f32 %v298, 0.0
      %v307 = vadd.f32 %v299, 0.0
      %v308 = vadd.f32 %v300, 0.0
      %v309 = vadd.f32 %v301, 0.0
      %v310 = vadd.f32 %v302, 0.0
      %v311 = vadd.f32 %v303, 0.0
      %v312 = vadd.f32 %v304, 0.0
      %313 = vset.pattern.permute.xlu0 1
      %314 = vperm.xlu0 %313, %v172
      %v315 = vpop.permute.xlu0 %314
      %316 = vset.pattern.permute.xlu0 1
      %317 = vperm.xlu0 %316, %v173
      %v318 = vpop.permute.xlu0 %317
      %319 = vset.pattern.permute.xlu0 1
      %320 = vperm.xlu0 %319, %v174
      %v321 = vpop.permute.xlu0 %320
      %322 = vset.pattern.permute.xlu0 1
      %323 = vperm.xlu0 %322, %v175
      %v324 = vpop.permute.xlu0 %323
      %325 = vset.pattern.permute.xlu0 1
      %326 = vperm.xlu0 %325, %v176
      %v327 = vpop.permute.xlu0 %326
      %328 = vset.pattern.permute.xlu0 1
      %329 = vperm.xlu0 %328, %v177
      %v330 = vpop.permute.xlu0 %329
      %331 = vset.pattern.permute.xlu0 1
      %332 = vperm.xlu0 %331, %v178
      %v333 = vpop.permute.xlu0 %332
      %334 = vset.pattern.permute.xlu0 1
      %335 = vperm.xlu0 %334, %v179
      %v336 = vpop.permute.xlu0 %335
      %vm337 = vcmp.eq.s32.totalorder %v181, %v315
      %vm338 = vcmp.eq.s32.totalorder %v181, %v318
      %vm339 = vcmp.eq.s32.totalorder %v181, %v321
      %vm340 = vcmp.eq.s32.totalorder %v181, %v324
      %vm341 = vcmp.eq.s32.totalorder %v181, %v327
      %vm342 = vcmp.eq.s32.totalorder %v181, %v330
      %vm343 = vcmp.eq.s32.totalorder %v181, %v333
      %vm344 = vcmp.eq.s32.totalorder %v181, %v336
      %v345 = vsel %vm337, %v164, 0.0
      %v346 = vsel %vm338, %v165, 0.0
      %v347 = vsel %vm339, %v166, 0.0
      %v348 = vsel %vm340, %v167, 0.0
      %v349 = vsel %vm341, %v168, 0.0
      %v350 = vsel %vm342, %v169, 0.0
      %v351 = vsel %vm343, %v170, 0.0
      %v352 = vsel %vm344, %v171, 0.0
      %353 = vadd.xlane.f32.xlu0 %v345
      %v354 = vpop.xlane.xlu0 %353
      %355 = vadd.xlane.f32.xlu0 %v346
      %v356 = vpop.xlane.xlu0 %355
      %357 = vadd.xlane.f32.xlu0 %v347
      %v358 = vpop.xlane.xlu0 %357
      %359 = vadd.xlane.f32.xlu0 %v348
      %v360 = vpop.xlane.xlu0 %359
      %361 = vadd.xlane.f32.xlu0 %v349
      %v362 = vpop.xlane.xlu0 %361
      %363 = vadd.xlane.f32.xlu0 %v350
      %v364 = vpop.xlane.xlu0 %363
      %365 = vadd.xlane.f32.xlu0 %v351
      %v366 = vpop.xlane.xlu0 %365
      %367 = vadd.xlane.f32.xlu0 %v352
      %v368 = vpop.xlane.xlu0 %367
      %v369 = vsub.s32 %v172, 32
      %v370 = vsub.s32 %v173, 32
      %v371 = vsub.s32 %v174, 32
      %v372 = vsub.s32 %v175, 32
      %v373 = vsub.s32 %v176, 32
      %v374 = vsub.s32 %v177, 32
      %v375 = vsub.s32 %v178, 32
      %v376 = vsub.s32 %v179, 32
      %v377 = vcvt.s32.f32 %v369
      %v378 = vcvt.s32.f32 %v370
      %v379 = vcvt.s32.f32 %v371
      %v380 = vcvt.s32.f32 %v372
      %v381 = vcvt.s32.f32 %v373
      %v382 = vcvt.s32.f32 %v374
      %v383 = vcvt.s32.f32 %v375
      %v384 = vcvt.s32.f32 %v376
      %v385 = vlog2.pop %v354
      %v386 = vmul.f32 %v385, 0.6931472
      %v387 = vlog2.pop %v356
      %v388 = vmul.f32 %v387, 0.6931472
      %v389 = vlog2.pop %v358
      %v390 = vmul.f32 %v389, 0.6931472
      %v391 = vlog2.pop %v360
      %v392 = vmul.f32 %v391, 0.6931472
      %v393 = vlog2.pop %v362
      %v394 = vmul.f32 %v393, 0.6931472
      %v395 = vlog2.pop %v364
      %v396 = vmul.f32 %v395, 0.6931472
      %v397 = vlog2.pop %v366
      %v398 = vmul.f32 %v397, 0.6931472
      %v399 = vlog2.pop %v368
      %v400 = vmul.f32 %v399, 0.6931472
      %v401 = vmul.f32 %v377, %v386
      %v402 = vmul.f32 %v378, %v388
      %v403 = vmul.f32 %v379, %v390
      %v404 = vmul.f32 %v380, %v392
      %v405 = vmul.f32 %v381, %v394
      %v406 = vmul.f32 %v382, %v396
      %v407 = vmul.f32 %v383, %v398
      %v408 = vmul.f32 %v384, %v400
      %v409 = vsel %vm201, %v401, 0.0
      %v410 = vsel %vm202, %v402, 0.0
      %v411 = vsel %vm203, %v403, 0.0
      %v412 = vsel %vm204, %v404, 0.0
      %v413 = vsel %vm205, %v405, 0.0
      %v414 = vsel %vm206, %v406, 0.0
      %v415 = vsel %vm207, %v407, 0.0
      %v416 = vsel %vm208, %v408, 0.0
      %425 = vrot.lane.b32.xlu0 %v409, 127
      %v426 = vpop.permute.xlu0 %425
      %427 = vrot.lane.b32.xlu0 %v410, 127
      %v428 = vpop.permute.xlu0 %427
      %429 = vrot.lane.b32.xlu0 %v411, 127
      %v430 = vpop.permute.xlu0 %429
      %431 = vrot.lane.b32.xlu0 %v412, 127
      %v432 = vpop.permute.xlu0 %431
      %433 = vrot.lane.b32.xlu0 %v413, 127
      %v434 = vpop.permute.xlu0 %433
      %435 = vrot.lane.b32.xlu0 %v414, 127
      %v436 = vpop.permute.xlu0 %435
      %437 = vrot.lane.b32.xlu0 %v415, 127
      %v438 = vpop.permute.xlu0 %437
      %439 = vrot.lane.b32.xlu0 %v416, 127
      %v440 = vpop.permute.xlu0 %439
      %v449 = vadd.f32 %v305, %v426
      %v450 = vadd.f32 %v306, %v428
      %v451 = vadd.f32 %v307, %v430
      %v452 = vadd.f32 %v308, %v432
      %v453 = vadd.f32 %v309, %v434
      %v454 = vadd.f32 %v310, %v436
      %v455 = vadd.f32 %v311, %v438
      %v456 = vadd.f32 %v312, %v440
      %457 = vset.pattern.permute.xlu0 2
      %458 = vperm.xlu0 %457, %v172
      %v459 = vpop.permute.xlu0 %458
      %460 = vset.pattern.permute.xlu0 2
      %461 = vperm.xlu0 %460, %v173
      %v462 = vpop.permute.xlu0 %461
      %463 = vset.pattern.permute.xlu0 2
      %464 = vperm.xlu0 %463, %v174
      %v465 = vpop.permute.xlu0 %464
      %466 = vset.pattern.permute.xlu0 2
      %467 = vperm.xlu0 %466, %v175
      %v468 = vpop.permute.xlu0 %467
      %469 = vset.pattern.permute.xlu0 2
      %470 = vperm.xlu0 %469, %v176
      %v471 = vpop.permute.xlu0 %470
      %472 = vset.pattern.permute.xlu0 2
      %473 = vperm.xlu0 %472, %v177
      %v474 = vpop.permute.xlu0 %473
      %475 = vset.pattern.permute.xlu0 2
      %476 = vperm.xlu0 %475, %v178
      %v477 = vpop.permute.xlu0 %476
      %478 = vset.pattern.permute.xlu0 2
      %479 = vperm.xlu0 %478, %v179
      %v480 = vpop.permute.xlu0 %479
      %vm481 = vcmp.eq.s32.totalorder %v181, %v459
      %vm482 = vcmp.eq.s32.totalorder %v181, %v462
      %vm483 = vcmp.eq.s32.totalorder %v181, %v465
      %vm484 = vcmp.eq.s32.totalorder %v181, %v468
      %vm485 = vcmp.eq.s32.totalorder %v181, %v471
      %vm486 = vcmp.eq.s32.totalorder %v181, %v474
      %vm487 = vcmp.eq.s32.totalorder %v181, %v477
      %vm488 = vcmp.eq.s32.totalorder %v181, %v480
      %v489 = vsel %vm481, %v164, 0.0
      %v490 = vsel %vm482, %v165, 0.0
      %v491 = vsel %vm483, %v166, 0.0
      %v492 = vsel %vm484, %v167, 0.0
      %v493 = vsel %vm485, %v168, 0.0
      %v494 = vsel %vm486, %v169, 0.0
      %v495 = vsel %vm487, %v170, 0.0
      %v496 = vsel %vm488, %v171, 0.0
      %497 = vadd.xlane.f32.xlu0 %v489
      %v498 = vpop.xlane.xlu0 %497
      %499 = vadd.xlane.f32.xlu0 %v490
      %v500 = vpop.xlane.xlu0 %499
      %501 = vadd.xlane.f32.xlu0 %v491
      %v502 = vpop.xlane.xlu0 %501
      %503 = vadd.xlane.f32.xlu0 %v492
      %v504 = vpop.xlane.xlu0 %503
      %505 = vadd.xlane.f32.xlu0 %v493
      %v506 = vpop.xlane.xlu0 %505
      %507 = vadd.xlane.f32.xlu0 %v494
      %v508 = vpop.xlane.xlu0 %507
      %509 = vadd.xlane.f32.xlu0 %v495
      %v510 = vpop.xlane.xlu0 %509
      %511 = vadd.xlane.f32.xlu0 %v496
      %v512 = vpop.xlane.xlu0 %511
      %v513 = vsub.s32 %v172, 64
      %v514 = vsub.s32 %v173, 64
      %v515 = vsub.s32 %v174, 64
      %v516 = vsub.s32 %v175, 64
      %v517 = vsub.s32 %v176, 64
      %v518 = vsub.s32 %v177, 64
      %v519 = vsub.s32 %v178, 64
      %v520 = vsub.s32 %v179, 64
      %v521 = vcvt.s32.f32 %v513
      %v522 = vcvt.s32.f32 %v514
      %v523 = vcvt.s32.f32 %v515
      %v524 = vcvt.s32.f32 %v516
      %v525 = vcvt.s32.f32 %v517
      %v526 = vcvt.s32.f32 %v518
      %v527 = vcvt.s32.f32 %v519
      %v528 = vcvt.s32.f32 %v520
      %v529 = vlog2.pop %v498
      %v530 = vmul.f32 %v529, 0.6931472
      %v531 = vlog2.pop %v500
      %v532 = vmul.f32 %v531, 0.6931472
      %v533 = vlog2.pop %v502
      %v534 = vmul.f32 %v533, 0.6931472
      %v535 = vlog2.pop %v504
      %v536 = vmul.f32 %v535, 0.6931472
      %v537 = vlog2.pop %v506
      %v538 = vmul.f32 %v537, 0.6931472
      %v539 = vlog2.pop %v508
      %v540 = vmul.f32 %v539, 0.6931472
      %v541 = vlog2.pop %v510
      %v542 = vmul.f32 %v541, 0.6931472
      %v543 = vlog2.pop %v512
      %v544 = vmul.f32 %v543, 0.6931472
      %v545 = vmul.f32 %v521, %v530
      %v546 = vmul.f32 %v522, %v532
      %v547 = vmul.f32 %v523, %v534
      %v548 = vmul.f32 %v524, %v536
      %v549 = vmul.f32 %v525, %v538
      %v550 = vmul.f32 %v526, %v540
      %v551 = vmul.f32 %v527, %v542
      %v552 = vmul.f32 %v528, %v544
      %v553 = vsel %vm201, %v545, 0.0
      %v554 = vsel %vm202, %v546, 0.0
      %v555 = vsel %vm203, %v547, 0.0
      %v556 = vsel %vm204, %v548, 0.0
      %v557 = vsel %vm205, %v549, 0.0
      %v558 = vsel %vm206, %v550, 0.0
      %v559 = vsel %vm207, %v551, 0.0
      %v560 = vsel %vm208, %v552, 0.0
      %569 = vrot.lane.b32.xlu0 %v553, 126
      %v570 = vpop.permute.xlu0 %569
      %571 = vrot.lane.b32.xlu0 %v554, 126
      %v572 = vpop.permute.xlu0 %571
      %573 = vrot.lane.b32.xlu0 %v555, 126
      %v574 = vpop.permute.xlu0 %573
      %575 = vrot.lane.b32.xlu0 %v556, 126
      %v576 = vpop.permute.xlu0 %575
      %577 = vrot.lane.b32.xlu0 %v557, 126
      %v578 = vpop.permute.xlu0 %577
      %579 = vrot.lane.b32.xlu0 %v558, 126
      %v580 = vpop.permute.xlu0 %579
      %581 = vrot.lane.b32.xlu0 %v559, 126
      %v582 = vpop.permute.xlu0 %581
      %583 = vrot.lane.b32.xlu0 %v560, 126
      %v584 = vpop.permute.xlu0 %583
      %v593 = vadd.f32 %v449, %v570
      %v594 = vadd.f32 %v450, %v572
      %v595 = vadd.f32 %v451, %v574
      %v596 = vadd.f32 %v452, %v576
      %v597 = vadd.f32 %v453, %v578
      %v598 = vadd.f32 %v454, %v580
      %v599 = vadd.f32 %v455, %v582
      %v600 = vadd.f32 %v456, %v584
      %601 = vset.pattern.permute.xlu0 3
      %602 = vperm.xlu0 %601, %v172
      %v603 = vpop.permute.xlu0 %602
      %604 = vset.pattern.permute.xlu0 3
      %605 = vperm.xlu0 %604, %v173
      %v606 = vpop.permute.xlu0 %605
      %607 = vset.pattern.permute.xlu0 3
      %608 = vperm.xlu0 %607, %v174
      %v609 = vpop.permute.xlu0 %608
      %610 = vset.pattern.permute.xlu0 3
      %611 = vperm.xlu0 %610, %v175
      %v612 = vpop.permute.xlu0 %611
      %613 = vset.pattern.permute.xlu0 3
      %614 = vperm.xlu0 %613, %v176
      %v615 = vpop.permute.xlu0 %614
      %616 = vset.pattern.permute.xlu0 3
      %617 = vperm.xlu0 %616, %v177
      %v618 = vpop.permute.xlu0 %617
      %619 = vset.pattern.permute.xlu0 3
      %620 = vperm.xlu0 %619, %v178
      %v621 = vpop.permute.xlu0 %620
      %622 = vset.pattern.permute.xlu0 3
      %623 = vperm.xlu0 %622, %v179
      %v624 = vpop.permute.xlu0 %623
      %vm625 = vcmp.eq.s32.totalorder %v181, %v603
      %vm626 = vcmp.eq.s32.totalorder %v181, %v606
      %vm627 = vcmp.eq.s32.totalorder %v181, %v609
      %vm628 = vcmp.eq.s32.totalorder %v181, %v612
      %vm629 = vcmp.eq.s32.totalorder %v181, %v615
      %vm630 = vcmp.eq.s32.totalorder %v181, %v618
      %vm631 = vcmp.eq.s32.totalorder %v181, %v621
      %vm632 = vcmp.eq.s32.totalorder %v181, %v624
      %v633 = vsel %vm625, %v164, 0.0
      %v634 = vsel %vm626, %v165, 0.0
      %v635 = vsel %vm627, %v166, 0.0
      %v636 = vsel %vm628, %v167, 0.0
      %v637 = vsel %vm629, %v168, 0.0
      %v638 = vsel %vm630, %v169, 0.0
      %v639 = vsel %vm631, %v170, 0.0
      %v640 = vsel %vm632, %v171, 0.0
      %641 = vadd.xlane.f32.xlu0 %v633
      %v642 = vpop.xlane.xlu0 %641
      %643 = vadd.xlane.f32.xlu0 %v634
      %v644 = vpop.xlane.xlu0 %643
      %645 = vadd.xlane.f32.xlu0 %v635
      %v646 = vpop.xlane.xlu0 %645
      %647 = vadd.xlane.f32.xlu0 %v636
      %v648 = vpop.xlane.xlu0 %647
      %649 = vadd.xlane.f32.xlu0 %v637
      %v650 = vpop.xlane.xlu0 %649
      %651 = vadd.xlane.f32.xlu0 %v638
      %v652 = vpop.xlane.xlu0 %651
      %653 = vadd.xlane.f32.xlu0 %v639
      %v654 = vpop.xlane.xlu0 %653
      %655 = vadd.xlane.f32.xlu0 %v640
      %v656 = vpop.xlane.xlu0 %655
      %v657 = vsub.s32 %v172, 96
      %v658 = vsub.s32 %v173, 96
      %v659 = vsub.s32 %v174, 96
      %v660 = vsub.s32 %v175, 96
      %v661 = vsub.s32 %v176, 96
      %v662 = vsub.s32 %v177, 96
      %v663 = vsub.s32 %v178, 96
      %v664 = vsub.s32 %v179, 96
      %v665 = vcvt.s32.f32 %v657
      %v666 = vcvt.s32.f32 %v658
      %v667 = vcvt.s32.f32 %v659
      %v668 = vcvt.s32.f32 %v660
      %v669 = vcvt.s32.f32 %v661
      %v670 = vcvt.s32.f32 %v662
      %v671 = vcvt.s32.f32 %v663
      %v672 = vcvt.s32.f32 %v664
      %v673 = vlog2.pop %v642
      %v674 = vmul.f32 %v673, 0.6931472
      %v675 = vlog2.pop %v644
      %v676 = vmul.f32 %v675, 0.6931472
      %v677 = vlog2.pop %v646
      %v678 = vmul.f32 %v677, 0.6931472
      %v679 = vlog2.pop %v648
      %v680 = vmul.f32 %v679, 0.6931472
      %v681 = vlog2.pop %v650
      %v682 = vmul.f32 %v681, 0.6931472
      %v683 = vlog2.pop %v652
      %v684 = vmul.f32 %v683, 0.6931472
      %v685 = vlog2.pop %v654
      %v686 = vmul.f32 %v685, 0.6931472
      %v687 = vlog2.pop %v656
      %v688 = vmul.f32 %v687, 0.6931472
      %v689 = vmul.f32 %v665, %v674
      %v690 = vmul.f32 %v666, %v676
      %v691 = vmul.f32 %v667, %v678
      %v692 = vmul.f32 %v668, %v680
      %v693 = vmul.f32 %v669, %v682
      %v694 = vmul.f32 %v670, %v684
      %v695 = vmul.f32 %v671, %v686
      %v696 = vmul.f32 %v672, %v688
      %v697 = vsel %vm201, %v689, 0.0
      %v698 = vsel %vm202, %v690, 0.0
      %v699 = vsel %vm203, %v691, 0.0
      %v700 = vsel %vm204, %v692, 0.0
      %v701 = vsel %vm205, %v693, 0.0
      %v702 = vsel %vm206, %v694, 0.0
      %v703 = vsel %vm207, %v695, 0.0
      %v704 = vsel %vm208, %v696, 0.0
      %713 = vrot.lane.b32.xlu0 %v697, 125
      %v714 = vpop.permute.xlu0 %713
      %715 = vrot.lane.b32.xlu0 %v698, 125
      %v716 = vpop.permute.xlu0 %715
      %717 = vrot.lane.b32.xlu0 %v699, 125
      %v718 = vpop.permute.xlu0 %717
      %719 = vrot.lane.b32.xlu0 %v700, 125
      %v720 = vpop.permute.xlu0 %719
      %721 = vrot.lane.b32.xlu0 %v701, 125
      %v722 = vpop.permute.xlu0 %721
      %723 = vrot.lane.b32.xlu0 %v702, 125
      %v724 = vpop.permute.xlu0 %723
      %725 = vrot.lane.b32.xlu0 %v703, 125
      %v726 = vpop.permute.xlu0 %725
      %727 = vrot.lane.b32.xlu0 %v704, 125
      %v728 = vpop.permute.xlu0 %727
      %v737 = vadd.f32 %v593, %v714
      %v738 = vadd.f32 %v594, %v716
      %v739 = vadd.f32 %v595, %v718
      %v740 = vadd.f32 %v596, %v720
      %v741 = vadd.f32 %v597, %v722
      %v742 = vadd.f32 %v598, %v724
      %v743 = vadd.f32 %v599, %v726
      %v744 = vadd.f32 %v600, %v728
      %vm745 = vcmask 7168
      %v746 = vsel %vm745, %v737, 0.0
      %v747 = vsel %vm745, %v738, 0.0
      %v748 = vadd.f32 %v746, %v747
      %v749 = vsel %vm745, %v739, 0.0
      %v750 = vadd.f32 %v748, %v749
      %v751 = vsel %vm745, %v740, 0.0
      %v752 = vadd.f32 %v750, %v751
      %v753 = vsel %vm745, %v741, 0.0
      %v754 = vadd.f32 %v752, %v753
      %v755 = vsel %vm745, %v742, 0.0
      %v756 = vadd.f32 %v754, %v755
      %v757 = vsel %vm745, %v743, 0.0
      %v758 = vadd.f32 %v756, %v757
      %v759 = vsel %vm745, %v744, 0.0
      %v760 = vadd.f32 %v758, %v759
      %761 = vadd.xlane.f32.xlu0 %v760
      %v762 = vpop.xlane.xlu0 %761
      %v763 = vrot.slane %v762, 4
      %v764 = vadd.f32 %v762, %v763
      %v765 = vrot.slane %v764, 2
      %v766 = vadd.f32 %v764, %v765
      %v767 = vrot.slane %v766, 1
      %v768 = vadd.f32 %v766, %v767
      %s769 = vtos %v768
      %v770 = vstv %s769
      %771 = vst [vmem:[%s163] sm:$0x1] %v770
      %p772 = scmp.lt.s32.totalorder %s13, 1
      %s773 = scalar_select %p772, %s13, 1
      %s774 = scalar_lea.vmem %s2, %s773
      // Predicated region
      $region29: #{cic_cross_entropy_loss.1} parent=27 // pred_check
        %p775 = pneg %p83
      $region30: #{cic_cross_entropy_loss.1} parent=27 // pred_check_branch
        %777 = sbr.rel (%p775) target = $region32
      $region31: #{cic_cross_entropy_loss.1} parent=27 // pred_region
        _
      $region32: #{cic_cross_entropy_loss.1} parent=27 // pred_fallthru
        _
    $region28: #{cic_cross_entropy_loss.1} parent=5 // pred_fallthru
      _
    %p778 = scmp.le.s32.totalorder 2, %s8
    // Predicated region
    $region33: #{cic_cross_entropy_loss.1} parent=5 // pred_check
      %p779 = pneg %p778
    $region34: #{cic_cross_entropy_loss.1} parent=5 // pred_check_branch
      %781 = sbr.rel (%p779) target = $region36
    $region35: #{cic_cross_entropy_loss.1} parent=5 // pred_region
      %s782 = ssub.s32 %s8, 2
      // Predicated region
      $region37: #{cic_cross_entropy_loss.1} parent=35 // pred_check
        %p783 = pneg %p89
      $region38: #{cic_cross_entropy_loss.1} parent=35 // pred_check_branch
        %785 = sbr.rel (%p783) target = $region40
      $region39: #{cic_cross_entropy_loss.1} parent=35 // pred_region
        %p786 = scmp.lt.s32.totalorder %s14, 1
        %s787 = scalar_select %p786, %s14, 1
        %s788 = scalar_lea.vmem %s2, %s787
      $region40: #{cic_cross_entropy_loss.1} parent=35 // pred_fallthru
        _
    $region36: #{cic_cross_entropy_loss.1} parent=5 // pred_fallthru
      _
  $region6: #{cic_cross_entropy_loss.1} parent=0 // loop_footer
    %s12 = sadd.s32 1, %s8
  $region7: #{cic_cross_entropy_loss.1} parent=0 // loop_footer_branch
    %7 = sbr.rel target = $region3
  $region8: #{cic_cross_entropy_loss.1} parent=0 // loop_exit
    _

</llo_original>
